<compile_context>
chip_gen: v6e
topology: v6e:2x2x1
jax: 0.10.0
libtpu: 0.0.40
codegen_flags: <defaults>
</compile_context>

<pallas_src>
import jax
import jax.numpy as jnp
from jax import lax
from jax.experimental import pallas as pl
from jax.experimental.pallas import tpu as pltpu

EPS = 1e-5  # torch.nn.InstanceNorm2d default eps


def _round_up(x, m):
    return ((x + m - 1) // m) * m


def _padded_vmem_bytes(shape, dtype):
    """Physical VMEM bytes of a tile after (sublane, lane) padding (8*32/bits, 128)."""
    itemsize = jnp.dtype(dtype).itemsize
    dims = [int(d) for d in shape]
    if len(dims) == 1:
        dims = [1] + dims
    sub = 8 * max(1, 4 // itemsize)          # f32: 8, bf16: 16, int8: 32
    lead = 1
    for d in dims[:-2]:
        lead *= d
    return lead * _round_up(dims[-2], sub) * _round_up(dims[-1], 128) * itemsize


def single_conv(x_nchw, weight_oihw, bias=None, *,
                compute_dtype=jnp.bfloat16, cout_tile=None):
    """Conv2d(3x3, s1, p1, bias) + InstanceNorm2d(affine=False) + ReLU.

    x_nchw: (N, Cin, H, W), weight_oihw: (Cout, Cin, 3, 3), bias: (Cout,).
    NOTE: `bias` is accepted for nn.Conv2d API parity but intentionally unused -- a per-channel
    constant is removed exactly by the per-(N, C) mean subtraction of InstanceNorm2d(affine=False).
    Do NOT reuse this wrapper without the norm (or with affine=True).
    """
    N, Cin, H, W = x_nchw.shape
    Cout = weight_oihw.shape[0]
    HW = H * W
    K = 9 * Cin
    PAD = _round_up(W + 1, 128)        # lane-aligned halo for the flat padded image
    L = PAD + HW + PAD
    del bias

    # Cout tiling (second grid axis). InstanceNorm is per-channel, so no cross-tile reduction.
    # 256 suits the v6e/v7x 2x256^2 MXU; 128 is the right width on v5e -- pass cout_tile=128 there.
    if cout_tile is None:
        if Cout > 256 and Cout % 256 == 0:
            cout_tile = 256
        elif Cout > 128 and Cout % 128 == 0:
            cout_tile = 128
        else:
            cout_tile = Cout
    if Cout % cout_tile != 0:
        cout_tile = Cout
    n_ct = Cout // cout_tile

    # Layout glue: activation stays NCHW (free reshape, no HBM transpose); weights become
    # (Cout, 9*Cin) with columns ordered (ky, kx, cin) to match the slab rows.
    x_flat = x_nchw.reshape(N, Cin, HW)
    w_t = (jnp.transpose(weight_oihw, (0, 2, 3, 1))
           .reshape(Cout, K).astype(compute_dtype))

    def kernel(x_ref, w_ref, o_ref, xp_ref, p_ref):
        # x_ref : (1, Cin, HW)        input image, lane-dense (VMEM)
        # w_ref : (Ct, 9*Cin)         pre-transposed weights (VMEM)
        # o_ref : (1, Ct, HW)         output tile, lane-dense (VMEM)
        # xp_ref: (Cin, PAD+HW+PAD)   scratch: flat image with zeroed lane halo
        # p_ref : (9*Cin, HW)         scratch: im2col slab, rows ordered (ky, kx, cin)

        # Build padded image + im2col slab once per image (hoisted out of the Cout-tile axis;
        # scratch persists across the inner "arbitrary" grid axis).
        @pl.when(pl.program_id(1) == 0)
        def _build_im2col():
            zpad = jnp.zeros((Cin, PAD), xp_ref.dtype)
            xp_ref[:, pl.ds(0, PAD)] = zpad                      # left halo (covers row underflow)
            xp_ref[:, pl.ds(PAD + HW, PAD)] = zpad               # right halo (covers row overflow)
            xp_ref[:, pl.ds(PAD, HW)] = x_ref[0].astype(xp_ref.dtype)  # 128-aligned interior store

            # Column-validity masks (row validity is handled by the zero halos above).
            w_pos = lax.broadcasted_iota(jnp.int32, (1, HW), 1) % W
            left_ok = w_pos > 0            # tap kx == 0 invalid at w == 0
            right_ok = w_pos < (W - 1)     # tap kx == 2 invalid at w == W-1

            for ky in range(3):
                for kx in range(3):
                    t = ky * 3 + kx
                    off = (ky - 1) * W + (kx - 1)
                    src = xp_ref[:, pl.ds(PAD + off, HW)]        # shifted window, no reshape
                    if kx == 0:
                        src = jnp.where(left_ok, src, jnp.zeros_like(src))
                    elif kx == 2:
                        src = jnp.where(right_ok, src, jnp.zeros_like(src))
                    p_ref[pl.ds(t * Cin, Cin), :] = src          # lane-dense unmasked store

        # Single MXU matmul, f32 accumulation, result already channel-major (Ct, HW).
        # Conv bias intentionally omitted: it cancels exactly under InstanceNorm(affine=False).
        y = jnp.dot(w_ref[...], p_ref[...], preferred_element_type=jnp.float32)

        mean = jnp.mean(y, axis=1, keepdims=True)
        cen = y - mean
        var = jnp.mean(cen * cen, axis=1, keepdims=True)   # biased variance, like InstanceNorm2d
        y = cen * jax.lax.rsqrt(var + EPS)
        o_ref[0] = jnp.maximum(y, 0.0).astype(o_ref.dtype)  # ReLU, lane-dense store

    # VMEM budget from physically padded tile sizes (double-buffered pipeline blocks + scratch).
    footprint = (
        2 * _padded_vmem_bytes((1, Cin, HW), x_flat.dtype)
        + 2 * _padded_vmem_bytes((cout_tile, K), compute_dtype)
        + 2 * _padded_vmem_bytes((1, cout_tile, HW), jnp.float32)
        + _padded_vmem_bytes((Cin, L), compute_dtype)
        + _padded_vmem_bytes((K, HW), compute_dtype)
    )
    chip_vmem = 64 << 20   # conservative fallback = v7x per-TensorCore VMEM
    try:
        chip_vmem = int(getattr(pltpu.get_tpu_info(), "vmem_capacity_bytes", chip_vmem))
    except Exception:
        pass
    vmem_limit = None
    if footprint > (12 << 20):  # only override the scoped default when actually needed
        vmem_limit = min(int(footprint * 3 // 2) + (4 << 20), int(0.85 * chip_vmem))
    # TODO(synk): when the per-image footprint exceeds ~0.75x chip VMEM (v7x hits this at ~half the
    # image size of v5e/v6e), add H-tiling with a two-pass sum/sumsq InstanceNorm instead of
    # whole-image residency.

    out = pl.pallas_call(
        kernel,
        out_shape=jax.ShapeDtypeStruct((N, Cout, HW), jnp.float32),
        grid_spec=pltpu.PrefetchScalarGridSpec(
            num_scalar_prefetch=0,
            grid=(N, n_ct),
            in_specs=[
                pl.BlockSpec((1, Cin, HW), lambda n, c: (n, 0, 0)),
                pl.BlockSpec((cout_tile, K), lambda n, c: (c, 0)),
            ],
            out_specs=pl.BlockSpec((1, cout_tile, HW), lambda n, c: (n, c, 0)),
            scratch_shapes=[
                pltpu.VMEM((Cin, L), compute_dtype),   # lane-padded flat image
                pltpu.VMEM((K, HW), compute_dtype),    # im2col slab
            ],
        ),
        compiler_params=pltpu.CompilerParams(
            dimension_semantics=("parallel", "arbitrary"),
            vmem_limit_bytes=vmem_limit),
    )(x_flat, w_t)

    # Lane-dense kernel output (N, Cout, H*W) -> NCHW is a free reshape (no transpose).
    return out.reshape(N, Cout, H, W)


def single_conv_ref(x_nchw, weight_oihw, bias):
    """Pure-JAX reference mirroring the PyTorch module exactly (bias included)."""
    y = jax.lax.conv_general_dilated(
        x_nchw, weight_oihw, window_strides=(1, 1), padding=((1, 1), (1, 1)),
        dimension_numbers=("NCHW", "OIHW", "NCHW"))
    y = y + bias.reshape(1, -1, 1, 1)
    mean = jnp.mean(y, axis=(2, 3), keepdims=True)
    var = jnp.mean((y - mean) ** 2, axis=(2, 3), keepdims=True)
    y = (y - mean) * jax.lax.rsqrt(var + EPS)
    return jnp.maximum(y, 0.0)


if __name__ == "__main__":
    key = jax.random.PRNGKey(0)
    k_x, k_w, k_b = jax.random.split(key, 3)

    N, C_IN, C_OUT, H, W = 2, 4, 8, 16, 16

    x = jax.random.normal(k_x, (N, C_IN, H, W), dtype=jnp.float32)

    # Deterministic parameter init (Kaiming-uniform-like bounds, same shapes as nn.Conv2d).
    fan_in = C_IN * 3 * 3
    bound_w = (6.0 / fan_in) ** 0.5
    weight = jax.random.uniform(k_w, (C_OUT, C_IN, 3, 3),
                                minval=-bound_w, maxval=bound_w, dtype=jnp.float32)
    bound_b = 1.0 / (fan_in ** 0.5)
    bias = jax.random.uniform(k_b, (C_OUT,), minval=-bound_b, maxval=bound_b,
                              dtype=jnp.float32)

    ref = jax.block_until_ready(single_conv_ref(x, weight, bias))

    # f32 MXU operands: tight check of the kernel logic.
    out_f32 = jax.block_until_ready(
        single_conv(x, weight, bias, compute_dtype=jnp.float32))
    assert out_f32.shape == (N, C_OUT, H, W)
    err32 = float(jnp.max(jnp.abs(out_f32 - ref)))
    assert jnp.allclose(out_f32, ref, atol=2e-4, rtol=2e-4), f"f32 max abs err {err32}"

    # bf16 MXU operands (default; MXU-native on v5e/v6e/v7x), f32 accumulation + f32 norm math.
    out_bf16 = jax.block_until_ready(single_conv(x, weight, bias))
    errbf = float(jnp.max(jnp.abs(out_bf16 - ref)))
    assert jnp.allclose(out_bf16, ref, atol=5e-2, rtol=5e-2), f"bf16 max abs err {errbf}"

    print("KERNEL_OK")
</pallas_src>

<mosaic_0001>
module attributes {stable_mosaic.version = 11 : i64} {
  func.func @kernel(%arg0: i32, %arg1: i32, %arg2: memref<1x4x256xf32, #tpu.memory_space<vmem>>, %arg3: memref<8x36xf32, #tpu.memory_space<vmem>>, %arg4: memref<1x8x256xf32, #tpu.memory_space<vmem>>, %arg5: memref<4x512xf32, #tpu.memory_space<vmem>>, %arg6: memref<36x256xf32, #tpu.memory_space<vmem>>) attributes {dimension_semantics = [#tpu.dimension_semantics<parallel>, #tpu.dimension_semantics<arbitrary>], iteration_bounds = array<i64: 2, 1>, scalar_prefetch = 0 : i64, scratch_operands = 2 : i64, tpu.core_type = #tpu.core_type<tc>, window_params = [{transform_indices = @transform_0, window_bounds = array<i64: 1, 4, 256>}, {transform_indices = @transform_1, window_bounds = array<i64: 8, 36>}, {transform_indices = @transform_2, window_bounds = array<i64: 1, 8, 256>}]} {
    %c0_i32 = arith.constant 0 : i32
    %0 = arith.cmpi eq, %arg1, %c0_i32 : i32
    %1 = arith.extui %0 : i1 to i32
    %c0_i32_0 = arith.constant 0 : i32
    %2 = arith.cmpi ne, %1, %c0_i32_0 : i32
    scf.if %2 {
      %cst_13 = arith.constant 0.000000e+00 : f32
      %27 = vector.broadcast %cst_13 : f32 to vector<4x128xf32>
      %c0_14 = arith.constant 0 : index
      %c0_15 = arith.constant 0 : index
      %28 = vector.load %arg5[%c0_14, %c0_15] : memref<4x512xf32, #tpu.memory_space<vmem>>, vector<4x128xf32>
      tpu.vector_store %arg5[%c0_14, %c0_15], %27 {strides = array<i32>} : memref<4x512xf32, #tpu.memory_space<vmem>>, vector<4x128xf32>,
      %c0_16 = arith.constant 0 : index
      %c384 = arith.constant 384 : index
      %29 = vector.load %arg5[%c0_16, %c384] : memref<4x512xf32, #tpu.memory_space<vmem>>, vector<4x128xf32>
      tpu.vector_store %arg5[%c0_16, %c384], %27 {strides = array<i32>} : memref<4x512xf32, #tpu.memory_space<vmem>>, vector<4x128xf32>,
      %c0_17 = arith.constant 0 : index
      %c0_18 = arith.constant 0 : index
      %c0_19 = arith.constant 0 : index
      %30 = vector.load %arg2[%c0_17, %c0_18, %c0_19] : memref<1x4x256xf32, #tpu.memory_space<vmem>>, vector<1x4x256xf32>
      %31 = vector.shape_cast %30 : vector<1x4x256xf32> to vector<4x256xf32>
      %c0_20 = arith.constant 0 : index
      %c128 = arith.constant 128 : index
      %32 = vector.load %arg5[%c0_20, %c128] : memref<4x512xf32, #tpu.memory_space<vmem>>, vector<4x256xf32>
      tpu.vector_store %arg5[%c0_20, %c128], %31 {strides = array<i32>} : memref<4x512xf32, #tpu.memory_space<vmem>>, vector<4x256xf32>,
      %33 = tpu.iota {dimensions = array<i32: 1>} : vector<1x256xi32>
      %c16_i32 = arith.constant 16 : i32
      %c0_i32_21 = arith.constant 0 : i32
      %34 = arith.cmpi eq, %c16_i32, %c0_i32_21 : i32
      %c1_i32 = arith.constant 1 : i32
      %35 = arith.select %34, %c1_i32, %c16_i32 : i32
      %36 = vector.broadcast %35 : i32 to vector<1x256xi32>
      %37 = arith.remsi %33, %36 : vector<1x256xi32>
      %c0_i32_22 = arith.constant 0 : i32
      %38 = vector.broadcast %c0_i32_22 : i32 to vector<1x256xi32>
      %39 = arith.cmpi ne, %37, %38 : vector<1x256xi32>
      %c0_i32_23 = arith.constant 0 : i32
      %40 = vector.broadcast %c0_i32_23 : i32 to vector<1x256xi32>
      %41 = arith.cmpi slt, %37, %40 : vector<1x256xi32>
      %c0_i32_24 = arith.constant 0 : i32
      %42 = arith.cmpi slt, %35, %c0_i32_24 : i32
      %43 = vector.broadcast %42 : i1 to vector<1x256xi1>
      %44 = vector.broadcast %43 : vector<1x256xi1> to vector<1x256xi1>
      %45 = arith.xori %41, %44 : vector<1x256xi1>
      %46 = arith.andi %45, %39 : vector<1x256xi1>
      %47 = vector.broadcast %35 : i32 to vector<1x256xi32>
      %48 = arith.addi %37, %47 : vector<1x256xi32>
      %49 = arith.select %46, %48, %37 : vector<1x256xi1>, vector<1x256xi32>
      %c0_i32_25 = arith.constant 0 : i32
      %50 = vector.broadcast %c0_i32_25 : i32 to vector<1x256xi32>
      %51 = arith.cmpi sgt, %49, %50 : vector<1x256xi32>
      %c15_i32 = arith.constant 15 : i32
      %52 = vector.broadcast %c15_i32 : i32 to vector<1x256xi32>
      %53 = arith.cmpi slt, %49, %52 : vector<1x256xi32>
      %c0_26 = arith.constant 0 : index
      %c111 = arith.constant 111 : index
      %54 = vector.load %arg5[%c0_26, %c111] : memref<4x512xf32, #tpu.memory_space<vmem>>, vector<4x256xf32>
      %cst_27 = arith.constant 0.000000e+00 : f32
      %55 = vector.broadcast %cst_27 : f32 to vector<4x256xf32>
      %56 = vector.shape_cast %51 : vector<1x256xi1> to vector<1x256xi1>
      %57 = vector.broadcast %56 : vector<1x256xi1> to vector<4x256xi1>
      %58 = arith.select %57, %54, %55 : vector<4x256xi1>, vector<4x256xf32>
      %c0_28 = arith.constant 0 : index
      %c0_29 = arith.constant 0 : index
      %59 = vector.load %arg6[%c0_28, %c0_29] : memref<36x256xf32, #tpu.memory_space<vmem>>, vector<4x256xf32>
      tpu.vector_store %arg6[%c0_28, %c0_29], %58 {strides = array<i32>} : memref<36x256xf32, #tpu.memory_space<vmem>>, vector<4x256xf32>,
      %c0_30 = arith.constant 0 : index
      %c112 = arith.constant 112 : index
      %60 = vector.load %arg5[%c0_30, %c112] : memref<4x512xf32, #tpu.memory_space<vmem>>, vector<4x256xf32>
      %c4 = arith.constant 4 : index
      %c0_31 = arith.constant 0 : index
      %61 = vector.load %arg6[%c4, %c0_31] : memref<36x256xf32, #tpu.memory_space<vmem>>, vector<4x256xf32>
      tpu.vector_store %arg6[%c4, %c0_31], %60 {strides = array<i32>} : memref<36x256xf32, #tpu.memory_space<vmem>>, vector<4x256xf32>,
      %c0_32 = arith.constant 0 : index
      %c113 = arith.constant 113 : index
      %62 = vector.load %arg5[%c0_32, %c113] : memref<4x512xf32, #tpu.memory_space<vmem>>, vector<4x256xf32>
      %cst_33 = arith.constant 0.000000e+00 : f32
      %63 = vector.broadcast %cst_33 : f32 to vector<4x256xf32>
      %64 = vector.shape_cast %53 : vector<1x256xi1> to vector<1x256xi1>
      %65 = vector.broadcast %64 : vector<1x256xi1> to vector<4x256xi1>
      %66 = arith.select %65, %62, %63 : vector<4x256xi1>, vector<4x256xf32>
      %c8 = arith.constant 8 : index
      %c0_34 = arith.constant 0 : index
      %67 = vector.load %arg6[%c8, %c0_34] : memref<36x256xf32, #tpu.memory_space<vmem>>, vector<4x256xf32>
      tpu.vector_store %arg6[%c8, %c0_34], %66 {strides = array<i32>} : memref<36x256xf32, #tpu.memory_space<vmem>>, vector<4x256xf32>,
      %c0_35 = arith.constant 0 : index
      %c127 = arith.constant 127 : index
      %68 = vector.load %arg5[%c0_35, %c127] : memref<4x512xf32, #tpu.memory_space<vmem>>, vector<4x256xf32>
      %cst_36 = arith.constant 0.000000e+00 : f32
      %69 = vector.broadcast %cst_36 : f32 to vector<4x256xf32>
      %70 = vector.shape_cast %51 : vector<1x256xi1> to vector<1x256xi1>
      %71 = vector.broadcast %70 : vector<1x256xi1> to vector<4x256xi1>
      %72 = arith.select %71, %68, %69 : vector<4x256xi1>, vector<4x256xf32>
      %c12 = arith.constant 12 : index
      %c0_37 = arith.constant 0 : index
      %73 = vector.load %arg6[%c12, %c0_37] : memref<36x256xf32, #tpu.memory_space<vmem>>, vector<4x256xf32>
      tpu.vector_store %arg6[%c12, %c0_37], %72 {strides = array<i32>} : memref<36x256xf32, #tpu.memory_space<vmem>>, vector<4x256xf32>,
      %c0_38 = arith.constant 0 : index
      %c128_39 = arith.constant 128 : index
      %74 = vector.load %arg5[%c0_38, %c128_39] : memref<4x512xf32, #tpu.memory_space<vmem>>, vector<4x256xf32>
      %c16 = arith.constant 16 : index
      %c0_40 = arith.constant 0 : index
      %75 = vector.load %arg6[%c16, %c0_40] : memref<36x256xf32, #tpu.memory_space<vmem>>, vector<4x256xf32>
      tpu.vector_store %arg6[%c16, %c0_40], %74 {strides = array<i32>} : memref<36x256xf32, #tpu.memory_space<vmem>>, vector<4x256xf32>,
      %c0_41 = arith.constant 0 : index
      %c129 = arith.constant 129 : index
      %76 = vector.load %arg5[%c0_41, %c129] : memref<4x512xf32, #tpu.memory_space<vmem>>, vector<4x256xf32>
      %cst_42 = arith.constant 0.000000e+00 : f32
      %77 = vector.broadcast %cst_42 : f32 to vector<4x256xf32>
      %78 = vector.shape_cast %53 : vector<1x256xi1> to vector<1x256xi1>
      %79 = vector.broadcast %78 : vector<1x256xi1> to vector<4x256xi1>
      %80 = arith.select %79, %76, %77 : vector<4x256xi1>, vector<4x256xf32>
      %c20 = arith.constant 20 : index
      %c0_43 = arith.constant 0 : index
      %81 = vector.load %arg6[%c20, %c0_43] : memref<36x256xf32, #tpu.memory_space<vmem>>, vector<4x256xf32>
      tpu.vector_store %arg6[%c20, %c0_43], %80 {strides = array<i32>} : memref<36x256xf32, #tpu.memory_space<vmem>>, vector<4x256xf32>,
      %c0_44 = arith.constant 0 : index
      %c143 = arith.constant 143 : index
      %82 = vector.load %arg5[%c0_44, %c143] : memref<4x512xf32, #tpu.memory_space<vmem>>, vector<4x256xf32>
      %cst_45 = arith.constant 0.000000e+00 : f32
      %83 = vector.broadcast %cst_45 : f32 to vector<4x256xf32>
      %84 = vector.shape_cast %51 : vector<1x256xi1> to vector<1x256xi1>
      %85 = vector.broadcast %84 : vector<1x256xi1> to vector<4x256xi1>
      %86 = arith.select %85, %82, %83 : vector<4x256xi1>, vector<4x256xf32>
      %c24 = arith.constant 24 : index
      %c0_46 = arith.constant 0 : index
      %87 = vector.load %arg6[%c24, %c0_46] : memref<36x256xf32, #tpu.memory_space<vmem>>, vector<4x256xf32>
      tpu.vector_store %arg6[%c24, %c0_46], %86 {strides = array<i32>} : memref<36x256xf32, #tpu.memory_space<vmem>>, vector<4x256xf32>,
      %c0_47 = arith.constant 0 : index
      %c144 = arith.constant 144 : index
      %88 = vector.load %arg5[%c0_47, %c144] : memref<4x512xf32, #tpu.memory_space<vmem>>, vector<4x256xf32>
      %c28 = arith.constant 28 : index
      %c0_48 = arith.constant 0 : index
      %89 = vector.load %arg6[%c28, %c0_48] : memref<36x256xf32, #tpu.memory_space<vmem>>, vector<4x256xf32>
      tpu.vector_store %arg6[%c28, %c0_48], %88 {strides = array<i32>} : memref<36x256xf32, #tpu.memory_space<vmem>>, vector<4x256xf32>,
      %c0_49 = arith.constant 0 : index
      %c145 = arith.constant 145 : index
      %90 = vector.load %arg5[%c0_49, %c145] : memref<4x512xf32, #tpu.memory_space<vmem>>, vector<4x256xf32>
      %cst_50 = arith.constant 0.000000e+00 : f32
      %91 = vector.broadcast %cst_50 : f32 to vector<4x256xf32>
      %92 = vector.shape_cast %53 : vector<1x256xi1> to vector<1x256xi1>
      %93 = vector.broadcast %92 : vector<1x256xi1> to vector<4x256xi1>
      %94 = arith.select %93, %90, %91 : vector<4x256xi1>, vector<4x256xf32>
      %c32 = arith.constant 32 : index
      %c0_51 = arith.constant 0 : index
      %95 = vector.load %arg6[%c32, %c0_51] : memref<36x256xf32, #tpu.memory_space<vmem>>, vector<4x256xf32>
      tpu.vector_store %arg6[%c32, %c0_51], %94 {strides = array<i32>} : memref<36x256xf32, #tpu.memory_space<vmem>>, vector<4x256xf32>,
    } else {
    }
    %c0 = arith.constant 0 : index
    %c0_1 = arith.constant 0 : index
    %3 = vector.load %arg3[%c0, %c0_1] : memref<8x36xf32, #tpu.memory_space<vmem>>, vector<8x36xf32>
    %c0_2 = arith.constant 0 : index
    %c0_3 = arith.constant 0 : index
    %4 = vector.load %arg6[%c0_2, %c0_3] : memref<36x256xf32, #tpu.memory_space<vmem>>, vector<36x256xf32>
    %cst = arith.constant dense<0.000000e+00> : vector<8x256xf32>
    %5 = tpu.matmul %3, %4, %cst {dimension_numbers = #tpu.dot_dimension_numbers<[1], [0], [0], [1], [0, 0, 1, 1], [], []>} : vector<8x36xf32>, vector<36x256xf32>, vector<8x256xf32> -> vector<8x256xf32>
    %cst_4 = arith.constant dense<0.000000e+00> : vector<8xf32>
    %6 = vector.multi_reduction <add>, %5, %cst_4 [1] : vector<8x256xf32> to vector<8xf32>
    %7 = vector.shape_cast %6 : vector<8xf32> to vector<8x1xf32>
    %cst_5 = arith.constant 2.560000e+02 : f32
    %8 = vector.broadcast %cst_5 : f32 to vector<8x1xf32>
    %9 = arith.divf %7, %8 : vector<8x1xf32>
    %10 = vector.broadcast %9 : vector<8x1xf32> to vector<8x256xf32>
    %11 = arith.subf %5, %10 : vector<8x256xf32>
    %12 = arith.mulf %11, %11 : vector<8x256xf32>
    %cst_6 = arith.constant dense<0.000000e+00> : vector<8xf32>
    %13 = vector.multi_reduction <add>, %12, %cst_6 [1] : vector<8x256xf32> to vector<8xf32>
    %14 = vector.shape_cast %13 : vector<8xf32> to vector<8x1xf32>
    %cst_7 = arith.constant 2.560000e+02 : f32
    %15 = vector.broadcast %cst_7 : f32 to vector<8x1xf32>
    %16 = arith.divf %14, %15 : vector<8x1xf32>
    %cst_8 = arith.constant 9.99999974E-6 : f32
    %17 = vector.broadcast %cst_8 : f32 to vector<8x1xf32>
    %18 = arith.addf %16, %17 : vector<8x1xf32>
    %19 = math.rsqrt %18 : vector<8x1xf32>
    %20 = vector.broadcast %19 : vector<8x1xf32> to vector<8x256xf32>
    %21 = arith.mulf %11, %20 : vector<8x256xf32>
    %cst_9 = arith.constant 0.000000e+00 : f32
    %22 = vector.broadcast %cst_9 : f32 to vector<8x256xf32>
    %23 = arith.maximumf %21, %22 : vector<8x256xf32>
    %c0_10 = arith.constant 0 : index
    %c0_11 = arith.constant 0 : index
    %c0_12 = arith.constant 0 : index
    %24 = vector.load %arg4[%c0_10, %c0_11, %c0_12] : memref<1x8x256xf32, #tpu.memory_space<vmem>>, vector<1x8x256xf32>
    %25 = vector.shape_cast %24 : vector<1x8x256xf32> to vector<8x256xf32>
    %26 = vector.shape_cast %23 : vector<8x256xf32> to vector<1x8x256xf32>
    tpu.vector_store %arg4[%c0_10, %c0_11, %c0_12], %26 {strides = array<i32>} : memref<1x8x256xf32, #tpu.memory_space<vmem>>, vector<1x8x256xf32>,
    return
  }
  func.func @transform_0(%arg0: i32, %arg1: i32) -> (i32, i32, i32) {
    %c0_i32 = arith.constant 0 : i32
    %c0_i32_0 = arith.constant 0 : i32
    %c0_i32_1 = arith.constant 0 : i32
    return %arg0, %c0_i32, %c0_i32_0 : i32, i32, i32
  }
  func.func @transform_1(%arg0: i32, %arg1: i32) -> (i32, i32) {
    %c0_i32 = arith.constant 0 : i32
    %c0_i32_0 = arith.constant 0 : i32
    return %arg1, %c0_i32 : i32, i32
  }
  func.func @transform_2(%arg0: i32, %arg1: i32) -> (i32, i32, i32) {
    %c0_i32 = arith.constant 0 : i32
    %c0_i32_0 = arith.constant 0 : i32
    return %arg0, %arg1, %c0_i32 : i32, i32, i32
  }
}

</mosaic_0001>

<llo_original>
// kernel: tpu_custom_call.1
$region0: #{tpu_custom_call.1}
  #allocation0 [shape = 'u32[]', space=smem, size = 0x4, offset = 0x4, fixed_abs, tag = 'smem constant byte address 0x4 - core index']
  #allocation1 [shape = 'u32[144,128]{1,0:T(1,128)}', space=vmem, size = 0x12000, scoped, tag = 'internal scratch']
  #allocation2 [shape = 'f32[4,512]{1,0:T(4,128)}', space=vmem, size = 0x2000, scoped, tag = 'scratch operand']
  #allocation3 [shape = 'f32[36,256]{1,0:T(8,128)}', space=vmem, size = 0xa000, scoped, tag = 'scratch operand']
  %s0 = inlined_call_operand.hbm [shape: f32[2,4,256], index: 0, kind: input, shape index: {}]
  %s1 = inlined_call_operand.hbm [shape: f32[8,36], index: 1, kind: input, shape index: {}]
  %s2 = inlined_call_operand.hbm [shape: f32[2,8,256], index: 2, kind: output, shape index: {}]
  %s3 = sld [smem:[#allocation0]]
  $region53: #{tpu_custom_call.1} parent=0
    _
  %s5 = ssub.s32 1, %s3
  %s6 = scalar_select 0, %s5, %s3
  $region1: #{tpu_custom_call.1} parent=0
    #allocation4 [shape = 'u8[8192]{0}', space=vmem, size = 0x2000, scoped, tag = 'input window, operand 0']
    #allocation5 [shape = 's32[2]{0}', space=sflag, size = 0x8, scoped, tag = 'scoped memory for tpu_custom_call.1']
    #allocation6 [shape = 's32[2]{0}', space=sflag, size = 0x8, scoped, tag = 'scoped memory for tpu_custom_call.1']
    #allocation7 [shape = 'u8[4096]{0}', space=vmem, size = 0x1000, scoped, tag = 'input window, operand 1, single buffered']
    #allocation8 [shape = 's32[1]{0}', space=sflag, size = 0x4, scoped, tag = 'scoped memory for tpu_custom_call.1']
    #allocation9 [shape = 'u8[16384]{0}', space=vmem, size = 0x4000, scoped, tag = 'output window, operand 0']
    %7 = vsyncpa [#allocation5], 0
    %s8 = scalar_lea.sflag [#allocation5], 1
    %9 = vsyncpa %s8, 0
    %10 = vsyncpa [#allocation8], 0
    %11 = vsyncpa [#allocation6], 0
    %s12 = scalar_lea.sflag [#allocation6], 1
    %13 = vsyncpa %s12, 0
    loop: start=0, step=1, limit=4
    $region2: #{tpu_custom_call.1} parent=1 // loop_pre_header
      _
    $region3: #{tpu_custom_call.1} parent=1 // loop_header
      %s15 = sphi 0, %s19
      %p16 = scmp.ge.s32.totalorder %s15, 4
      %s22 = sphi 0, %s34
      %s23 = sphi 0, %s30
      %s24 = sphi 0, %s22
      %s25 = sphi 0, %s23
      %s26 = sphi 0, %s24
      %s27 = sphi 0, %s25
      %s37 = sphi 0, %s39
      %s40 = sphi 0, %s37
      %s41 = sphi 0, %s40
      %s57 = sphi 0, %s41
      %s63 = sphi 0, %s65
      %s66 = sphi 0, %s63
      %s67 = sphi 0, %s66
      %s83 = sphi 0, %s67
      %s91 = sphi 0, %s93
      %s94 = sphi 0, %s91
      %s95 = sphi 0, %s94
      %s111 = sphi 0, %s95
    $region4: #{tpu_custom_call.1} parent=1 // loop_header_branch
      %18 = sbr.rel (%p16) target = $region8
    $region5: #{tpu_custom_call.1} parent=1 // loop_body
      %s20 = ssub.s32 %s15, 1
      %s21 = ssub.s32 %s15, 2
      %s28 = sadd.s32 1, %s23
      %p29 = scmp.ge.s32.totalorder %s28, 1
      %s30 = scalar_select %p29, 0, %s28
      %s31 = sadd.s32 1, %s22
      %s32 = scalar_select %p29, %s31, %s22
      %p33 = scmp.ge.s32.totalorder %s32, 2
      %s34 = scalar_select %p33, 0, %s32
      %s35 = ssub.s32 %s22, %s34
      %p36 = scmp.eq.s32.totalorder %s35, 0
      %s38 = sadd.s32 %s37, 1
      %s39 = scalar_select %p36, %s37, %s38
      %p42 = pneg %p36
      %p43 = scmp.eq.s32.totalorder %s15, 1
      %p44 = por %p42, %p43
      %p45 = scmp.ne.s32.totalorder %s37, %s40
      %p46 = scmp.eq.s32.totalorder %s15, 0
      %p47 = por %p45, %p46
      %p48 = scmp.ne.s32.totalorder %s37, %s40
      %p49 = scmp.eq.s32.totalorder %s20, 1
      %p50 = por %p48, %p49
      %p51 = scmp.ne.s32.totalorder %s40, %s41
      %p52 = scmp.eq.s32.totalorder %s20, 0
      %p53 = por %p51, %p52
      %p54 = scmp.ne.s32.totalorder %s40, %s41
      %p55 = scmp.eq.s32.totalorder %s21, 1
      %p56 = por %p54, %p55
      %p58 = scmp.ne.s32.totalorder %s41, %s57
      %p59 = scmp.eq.s32.totalorder %s21, 0
      %p60 = por %p58, %p59
      %s61 = ssub.s32 %s23, %s30
      %p62 = scmp.eq.s32.totalorder %s61, 0
      %s64 = sadd.s32 %s63, 1
      %s65 = scalar_select %p62, %s63, %s64
      %p68 = pneg %p62
      %p69 = scmp.eq.s32.totalorder %s15, 1
      %p70 = por %p68, %p69
      %p71 = scmp.ne.s32.totalorder %s63, %s66
      %p72 = scmp.eq.s32.totalorder %s15, 0
      %p73 = por %p71, %p72
      %p74 = scmp.ne.s32.totalorder %s63, %s66
      %p75 = scmp.eq.s32.totalorder %s20, 1
      %p76 = por %p74, %p75
      %p77 = scmp.ne.s32.totalorder %s66, %s67
      %p78 = scmp.eq.s32.totalorder %s20, 0
      %p79 = por %p77, %p78
      %p80 = scmp.ne.s32.totalorder %s66, %s67
      %p81 = scmp.eq.s32.totalorder %s21, 1
      %p82 = por %p80, %p81
      %p84 = scmp.ne.s32.totalorder %s67, %s83
      %p85 = scmp.eq.s32.totalorder %s21, 0
      %p86 = por %p84, %p85
      %s87 = ssub.s32 %s22, %s34
      %s88 = ssub.s32 %s23, %s30
      %s89 = sor.u32 %s87, %s88
      %p90 = scmp.eq.s32.totalorder %s89, 0
      %s92 = sadd.s32 %s91, 1
      %s93 = scalar_select %p90, %s91, %s92
      %p96 = pneg %p90
      %p97 = scmp.eq.s32.totalorder %s15, 1
      %p98 = por %p96, %p97
      %p99 = scmp.ne.s32.totalorder %s91, %s94
      %p100 = scmp.eq.s32.totalorder %s15, 0
      %p101 = por %p99, %p100
      %p102 = scmp.ne.s32.totalorder %s91, %s94
      %p103 = scmp.eq.s32.totalorder %s20, 1
      %p104 = por %p102, %p103
      %p105 = scmp.ne.s32.totalorder %s94, %s95
      %p106 = scmp.eq.s32.totalorder %s20, 0
      %p107 = por %p105, %p106
      %p108 = scmp.ne.s32.totalorder %s94, %s95
      %p109 = scmp.eq.s32.totalorder %s21, 1
      %p110 = por %p108, %p109
      %p112 = scmp.ne.s32.totalorder %s95, %s111
      %p113 = scmp.eq.s32.totalorder %s21, 0
      %p114 = por %p112, %p113
      %p115 = scmp.le.s32.totalorder 1, %s15
      %p116 = scmp.lt.s32.totalorder %s15, 3
      %p117 = pnand %p115, %p116
      %p118 = pneg %p117
      // Predicated region
      $region9: #{tpu_custom_call.1} parent=5 // pred_check
        _
      $region10: #{tpu_custom_call.1} parent=5 // pred_check_branch
        %120 = sbr.rel (%p117) target = $region12
      $region11: #{tpu_custom_call.1} parent=5 // pred_region
        %s121 = ssub.s32 %s15, 1
        // Predicated region
        $region13: #{tpu_custom_call.1} parent=11 // pred_check
          %p122 = pneg %p79
        $region14: #{tpu_custom_call.1} parent=11 // pred_check_branch
          %124 = sbr.rel (%p122) target = $region16
        $region15: #{tpu_custom_call.1} parent=11 // pred_region
          %s126 = ssub.s32 128, 128
          %127 = vsyncadd [#allocation8], %s126
          %s128 = smul.addr %s25, 128
          %s129 = scalar_lea.hbm %s1, %s128
          %s131 = sshll.u32 [#allocation7], 4
          %s132 = int_to_ptr.vmem [resolvable:$true] %s131
          %134 = dma.hbm_to_vmem [thread:$0]  %s129, 128, %s132, [#allocation8]
        $region16: #{tpu_custom_call.1} parent=11 // pred_fallthru
          _
      $region12: #{tpu_custom_call.1} parent=5 // pred_fallthru
        _
      %p135 = scmp.lt.s32.totalorder %s15, 2
      // Predicated region
      $region17: #{tpu_custom_call.1} parent=5 // pred_check
        %p136 = pneg %p135
      $region18: #{tpu_custom_call.1} parent=5 // pred_check_branch
        %138 = sbr.rel (%p136) target = $region20
      $region19: #{tpu_custom_call.1} parent=5 // pred_region
        // Predicated region
        $region21: #{tpu_custom_call.1} parent=19 // pred_check
          %p139 = pneg %p47
        $region22: #{tpu_custom_call.1} parent=19 // pred_check_branch
          %141 = sbr.rel (%p139) target = $region24
        $region23: #{tpu_custom_call.1} parent=19 // pred_region
          %s142 = sand.u32 %s37, 1
          %s143 = scalar_lea.sflag [#allocation5], %s142
          %s144 = sand.u32 %s37, 1
          %s145 = smul.addr %s144, 8
          %s146 = scalar_lea.vmem [#allocation4], %s145
          %s148 = ssub.s32 128, 128
          %149 = vsyncadd %s143, %s148
          %s150 = smul.addr %s22, 2
          %s151 = smul.addr %s150, 64
          %s152 = scalar_lea.hbm %s0, %s151
          %s154 = sshll.u32 %s146, 4
          %s155 = int_to_ptr.vmem [resolvable:$true] %s154
          %157 = dma.hbm_to_vmem [thread:$0]  %s152, 128, %s155, %s143
        $region24: #{tpu_custom_call.1} parent=19 // pred_fallthru
          _
      $region20: #{tpu_custom_call.1} parent=5 // pred_fallthru
        _
      %p158 = scmp.le.s32.totalorder 1, %s15
      %p159 = scmp.lt.s32.totalorder %s15, 3
      %p160 = pnand %p158, %p159
      %p161 = pneg %p160
      // Predicated region
      $region25: #{tpu_custom_call.1} parent=5 // pred_check
        _
      $region26: #{tpu_custom_call.1} parent=5 // pred_check_branch
        %163 = sbr.rel (%p160) target = $region28
      $region27: #{tpu_custom_call.1} parent=5 // pred_region
        %s164 = ssub.s32 %s15, 1
        %s165 = sand.u32 %s40, 1
        %s166 = scalar_lea.sflag [#allocation5], %s165
        %s167 = sand.u32 %s40, 1
        %s168 = smul.addr %s167, 8
        %s169 = scalar_lea.vmem [#allocation4], %s168
        // Predicated region
        $region29: #{tpu_custom_call.1} parent=27 // pred_check
          %p170 = pneg %p53
        $region30: #{tpu_custom_call.1} parent=27 // pred_check_branch
          %172 = sbr.rel (%p170) target = $region32
        $region31: #{tpu_custom_call.1} parent=27 // pred_region
          %173 = dma.done %s166, 128
        $region32: #{tpu_custom_call.1} parent=27 // pred_fallthru
          _
        // Predicated region
        $region33: #{tpu_custom_call.1} parent=27 // pred_check
          %p174 = pneg %p79
        $region34: #{tpu_custom_call.1} parent=27 // pred_check_branch
          %176 = sbr.rel (%p174) target = $region36
        $region35: #{tpu_custom_call.1} parent=27 // pred_region
          %177 = dma.done [#allocation8], 128
        $region36: #{tpu_custom_call.1} parent=27 // pred_fallthru
          _
        %s178 = sand.u32 %s40, 1
        %s179 = scalar_lea.sflag [#allocation5], %s178
        %s180 = sand.u32 %s40, 1
        %s181 = smul.addr %s180, 8
        %s182 = scalar_lea.vmem [#allocation4], %s181
        %p183 = pneg %p53
        %p184 = pneg %p50
        %p185 = pneg %p79
        %p186 = pneg %p76
        %p187 = pneg %p107
        %p188 = pneg %p104
        %s189 = sand.u32 %s94, 1
        %s190 = scalar_lea.sflag [#allocation6], %s189
        %s191 = sand.u32 %s94, 1
        %s192 = smul.addr %s191, 16
        %s193 = scalar_lea.vmem [#allocation9], %s192
        %p194 = scmp.eq.s32.totalorder %s25, 0
        // Predicated region
        $region37: #{tpu_custom_call.1} parent=27 // pred_check
          %p195 = pneg %p194
        $region38: #{tpu_custom_call.1} parent=27 // pred_check_branch
          %197 = sbr.rel (%p195) target = $region40
        $region39: #{tpu_custom_call.1} parent=27 // pred_region
          %198 = vst [vmem:[#allocation2] sm:$0xf] 0.0
          %199 = vst [vmem:[#allocation2 + $0xc] sm:$0xf] 0.0
          %v200 = vld [vmem:[%s169] sm:$0xff]
          %201 = vst [vmem:[#allocation2 + $0x4] sm:$0xff] %v200
          %v202 = vlaneseq
          %v203 = vand.u32 %v202, 127
          %v204 = vadd.s32 %v203, 128
          %vm205 = vcmp.lt.s32.totalorder %v203, 0
          %v206 = vsub.s32 0, %v203
          %v207 = vsel %vm205, %v206, %v203
          %v208 = vshrl.u32 %v207, 4
          %v209 = vand.u32 %v207, 15
          %v210 = vsub.s32 0, %v209
          %v211 = vsel %vm205, %v210, %v209
          %vm212 = vcmp.lt.s32.totalorder %v204, 0
          %v213 = vsub.s32 0, %v204
          %v214 = vsel %vm212, %v213, %v204
          %v215 = vshrl.u32 %v214, 4
          %v216 = vand.u32 %v214, 15
          %v217 = vsub.s32 0, %v216
          %v218 = vsel %vm212, %v217, %v216
          %vm219 = vcmp.ne.s32.totalorder %v211, 0
          %vm220 = vcmp.ne.s32.totalorder %v218, 0
          %vm221 = vcmp.lt.s32.totalorder %v211, 0
          %vm222 = vcmp.lt.s32.totalorder %v218, 0
          %vm223 = vmand %vm221, %vm219
          %vm224 = vmand %vm222, %vm220
          %v225 = vadd.s32 %v211, 16
          %v226 = vadd.s32 %v218, 16
          %v227 = vsel %vm223, %v225, %v211
          %v228 = vsel %vm224, %v226, %v218
          %vm229 = vcmp.gt.s32.totalorder %v227, 0
          %vm230 = vcmp.gt.s32.totalorder %v228, 0
          %vm231 = vcmp.lt.s32.totalorder %v227, 15
          %vm232 = vcmp.lt.s32.totalorder %v228, 15
          %v233 = vld [vmem:[#allocation2] sm:$0xff]
          %v234 = vld [vmem:[#allocation2 + $0x8] sm:$0xf]
          %v235 = vsel %vm229, 1, 0
          %v236 = vsel %vm230, 1, 0
          %vm237 = vcmp.eq.s32.totalorder %v235, 1
          %vm238 = vcmp.eq.s32.totalorder %v236, 1
          %v241 = vcombine.high %v233, %v233
          %242 = vrot.lane.b32.xlu0 %v233, 17
          %v243 = vpop.permute.xlu0 %242
          %244 = vrot.lane.b32.xlu0 %v241, 17
          %v245 = vpop.permute.xlu0 %244
          %246 = vrot.lane.b32.xlu0 %v234, 17
          %v247 = vpop.permute.xlu0 %246
          %vm248 = vcmask 138240
          %v249 = vsel %vm248, %v243, %v245
          %v250 = vsel %vm248, %v245, %v247
          %v253 = vsel %vm237, %v249, 0.0
          %v254 = vsel %vm238, %v250, 0.0
          %255 = vst [vmem:[#allocation3] sm:$0xf] %v253
          %256 = vst [vmem:[#allocation3 + $0x8] sm:$0xf] %v254
          %v257 = vld [vmem:[#allocation2] sm:$0xff]
          %v258 = vld [vmem:[#allocation2 + $0x8] sm:$0xf]
          %v261 = vcombine.low %v257, %v257
          %v262 = vcombine.low %v258, %v258
          %263 = vrot.lane.b32.xlu0 %v261, 16
          %v264 = vpop.permute.xlu0 %263
          %265 = vrot.lane.b32.xlu0 %v257, 16
          %v266 = vpop.permute.xlu0 %265
          %267 = vrot.lane.b32.xlu0 %v262, 16
          %v268 = vpop.permute.xlu0 %267
          %vm269 = vcmask 130048
          %v270 = vsel %vm269, %v264, %v266
          %v271 = vsel %vm269, %v266, %v268
          %274 = vst [vmem:[#allocation3] sm:$0xf0] %v270
          %275 = vst [vmem:[#allocation3 + $0x8] sm:$0xf0] %v271
          %v276 = vld [vmem:[#allocation2] sm:$0xff]
          %v277 = vld [vmem:[#allocation2 + $0x8] sm:$0xf]
          %v278 = vsel %vm231, 1, 0
          %v279 = vsel %vm232, 1, 0
          %vm280 = vcmp.eq.s32.totalorder %v278, 1
          %vm281 = vcmp.eq.s32.totalorder %v279, 1
          %v284 = vcombine.high %v276, %v276
          %285 = vrot.lane.b32.xlu0 %v276, 15
          %v286 = vpop.permute.xlu0 %285
          %287 = vrot.lane.b32.xlu0 %v284, 15
          %v288 = vpop.permute.xlu0 %287
          %289 = vrot.lane.b32.xlu0 %v277, 15
          %v290 = vpop.permute.xlu0 %289
          %vm291 = vcmask 121856
          %v292 = vsel %vm291, %v286, %v288
          %v293 = vsel %vm291, %v288, %v290
          %v296 = vsel %vm280, %v292, 0.0
          %v297 = vsel %vm281, %v293, 0.0
          %298 = vst [vmem:[#allocation3 + $0x10] sm:$0xf] %v296
          %299 = vst [vmem:[#allocation3 + $0x18] sm:$0xf] %v297
          %v300 = vld [vmem:[#allocation2] sm:$0xff]
          %v301 = vld [vmem:[#allocation2 + $0x8] sm:$0xf]
          %v304 = vcombine.high %v300, %v300
          %305 = vrot.lane.b32.xlu0 %v300, 1
          %v306 = vpop.permute.xlu0 %305
          %307 = vrot.lane.b32.xlu0 %v304, 1
          %v308 = vpop.permute.xlu0 %307
          %309 = vrot.lane.b32.xlu0 %v301, 1
          %v310 = vpop.permute.xlu0 %309
          %vm311 = vcmask 7168
          %v312 = vsel %vm311, %v306, %v308
          %v313 = vsel %vm311, %v308, %v310
          %v316 = vsel %vm237, %v312, 0.0
          %v317 = vsel %vm238, %v313, 0.0
          %v320 = vrot.slane %v316, 4
          %v321 = vrot.slane %v317, 4
          %324 = vst [vmem:[#allocation3 + $0x10] sm:$0xf0] %v320
          %325 = vst [vmem:[#allocation3 + $0x18] sm:$0xf0] %v321
          %v326 = vld [vmem:[#allocation2 + $0x4] sm:$0xff]
          %v328 = vcombine.high %v326, %v326
          %330 = vst [vmem:[#allocation3 + $0x20] sm:$0xf] %v326
          %331 = vst [vmem:[#allocation3 + $0x28] sm:$0xf] %v328
          %v332 = vld [vmem:[#allocation2 + $0x4] sm:$0xff]
          %v333 = vld [vmem:[#allocation2 + $0xc] sm:$0xf]
          %v336 = vcombine.high %v332, %v332
          %337 = vrot.lane.b32.xlu0 %v332, 127
          %v338 = vpop.permute.xlu0 %337
          %339 = vrot.lane.b32.xlu0 %v336, 127
          %v340 = vpop.permute.xlu0 %339
          %341 = vrot.lane.b32.xlu0 %v333, 127
          %v342 = vpop.permute.xlu0 %341
          %vm343 = vcmask 1039360
          %v344 = vsel %vm343, %v338, %v340
          %v345 = vsel %vm343, %v340, %v342
          %v348 = vsel %vm280, %v344, 0.0
          %v349 = vsel %vm281, %v345, 0.0
          %v352 = vrot.slane %v348, 4
          %v353 = vrot.slane %v349, 4
          %356 = vst [vmem:[#allocation3 + $0x20] sm:$0xf0] %v352
          %357 = vst [vmem:[#allocation3 + $0x28] sm:$0xf0] %v353
          %v358 = vld [vmem:[#allocation2 + $0x4] sm:$0xff]
          %v359 = vld [vmem:[#allocation2 + $0xc] sm:$0xf]
          %v362 = vcombine.high %v358, %v358
          %363 = vrot.lane.b32.xlu0 %v358, 113
          %v364 = vpop.permute.xlu0 %363
          %365 = vrot.lane.b32.xlu0 %v362, 113
          %v366 = vpop.permute.xlu0 %365
          %367 = vrot.lane.b32.xlu0 %v359, 113
          %v368 = vpop.permute.xlu0 %367
          %vm369 = vcmask 924672
          %v370 = vsel %vm369, %v364, %v366
          %v371 = vsel %vm369, %v366, %v368
          %v374 = vsel %vm237, %v370, 0.0
          %v375 = vsel %vm238, %v371, 0.0
          %376 = vst [vmem:[#allocation3 + $0x30] sm:$0xf] %v374
          %377 = vst [vmem:[#allocation3 + $0x38] sm:$0xf] %v375
          %v378 = vld [vmem:[#allocation2 + $0x4] sm:$0xff]
          %v379 = vld [vmem:[#allocation2 + $0xc] sm:$0xf]
          %v382 = vcombine.low %v378, %v378
          %v383 = vcombine.low %v379, %v379
          %384 = vrot.lane.b32.xlu0 %v382, 112
          %v385 = vpop.permute.xlu0 %384
          %386 = vrot.lane.b32.xlu0 %v378, 112
          %v387 = vpop.permute.xlu0 %386
          %388 = vrot.lane.b32.xlu0 %v383, 112
          %v389 = vpop.permute.xlu0 %388
          %vm390 = vcmask 916480
          %v391 = vsel %vm390, %v385, %v387
          %v392 = vsel %vm390, %v387, %v389
          %395 = vst [vmem:[#allocation3 + $0x30] sm:$0xf0] %v391
          %396 = vst [vmem:[#allocation3 + $0x38] sm:$0xf0] %v392
          %v397 = vld [vmem:[#allocation2 + $0x4] sm:$0xff]
          %v398 = vld [vmem:[#allocation2 + $0xc] sm:$0xf]
          %v401 = vcombine.high %v397, %v397
          %402 = vrot.lane.b32.xlu0 %v397, 111
          %v403 = vpop.permute.xlu0 %402
          %404 = vrot.lane.b32.xlu0 %v401, 111
          %v405 = vpop.permute.xlu0 %404
          %406 = vrot.lane.b32.xlu0 %v398, 111
          %v407 = vpop.permute.xlu0 %406
          %vm408 = vcmask 908288
          %v409 = vsel %vm408, %v403, %v405
          %v410 = vsel %vm408, %v405, %v407
          %v413 = vsel %vm280, %v409, 0.0
          %v414 = vsel %vm281, %v410, 0.0
          %415 = vst [vmem:[#allocation3 + $0x40] sm:$0xf] %v413
          %416 = vst [vmem:[#allocation3 + $0x48] sm:$0xf] %v414
        $region40: #{tpu_custom_call.1} parent=27 // pred_fallthru
          _
        %v417 = vld [vmem:[#allocation7] sm:$0xff]
        %v418 = vld [vmem:[#allocation3] sm:$0xff]
        %v419 = vld [vmem:[#allocation3 + $0x8] sm:$0xff]
        %v420 = vld [vmem:[#allocation3 + $0x10] sm:$0xff]
        %v421 = vld [vmem:[#allocation3 + $0x18] sm:$0xff]
        %v422 = vld [vmem:[#allocation3 + $0x20] sm:$0xff]
        %v423 = vld [vmem:[#allocation3 + $0x28] sm:$0xff]
        %v424 = vld [vmem:[#allocation3 + $0x30] sm:$0xff]
        %v425 = vld [vmem:[#allocation3 + $0x38] sm:$0xff]
        %v426 = vld [vmem:[#allocation3 + $0x40] sm:$0xf]
        %v427 = vld [vmem:[#allocation3 + $0x48] sm:$0xf]
        %vm428 = vcmask 293888
        %v430 = vsel %vm428, %v417, 0
        %vm432 = vcmask 1043456
        %v434 = vsel %vm432, %v426, 0
        %v437 = vsel %vm432, %v427, 0
        %439 = vmatprep.subr.mxu0 0.0
        %440 = vmatpush1.msra.mxu0 0.0
        %441 = vmatprep.subr.mxu0 0.0
        %442 = vmatpush1.msra.mxu0 0.0
        %443 = vmatprep.subr.mxu0 0.0
        %444 = vmatpush1.msra.mxu0 0.0
        %445 = vmatprep.subr.mxu0 0.0
        %446 = vmatpush1.msra.mxu0 0.0
        %447 = vmatprep.subr.mxu0 0.0
        %448 = vmatpush1.msra.mxu0 0.0
        %449 = vmatprep.subr.mxu0 0.0
        %450 = vmatpush1.msra.mxu0 0.0
        %451 = vmatprep.subr.mxu0 0.0
        %452 = vmatpush1.msra.mxu0 0.0
        %453 = vmatprep.subr.mxu0 0.0
        %454 = vmatpush1.msra.mxu0 0.0
        %455 = vmatprep.subr.mxu0 0.0
        %456 = vmatpush1.msra.mxu0 0.0
        %457 = vmatprep.subr.mxu0 0.0
        %458 = vmatpush1.msra.mxu0 0.0
        %459 = vmatprep.subr.mxu0 0.0
        %460 = vmatpush1.msra.mxu0 0.0
        %461 = vmatprep.subr.mxu0 %v437
        %462 = vmatpush1.msra.mxu0 %v434
        %463 = vmatprep.subr.mxu0 %v425
        %464 = vmatpush1.msra.mxu0 %v424
        %465 = vmatprep.subr.mxu0 %v423
        %466 = vmatpush1.msra.mxu0 %v422
        %467 = vmatprep.subr.mxu0 %v421
        %468 = vmatpush1.msra.mxu0 %v420
        %469 = vmatprep.subr.mxu0 %v419
        %470 = vmatpush1.msra.mxu0 %v418
        %471 = vmatprep.subr.mxu0 0.0
        %472 = vmatpush2.msra.mxu0 0.0
        %473 = vmatprep.subr.mxu0 0.0
        %474 = vmatpush2.msra.mxu0 0.0
        %475 = vmatprep.subr.mxu0 0.0
        %476 = vmatpush2.msra.mxu0 0.0
        %477 = vmatprep.subr.mxu0 0.0
        %478 = vmatpush2.msra.mxu0 0.0
        %479 = vmatprep.subr.mxu0 0.0
        %480 = vmatpush2.msra.mxu0 0.0
        %481 = vmatprep.subr.mxu0 0.0
        %482 = vmatpush2.msra.mxu0 0.0
        %483 = vmatprep.subr.mxu0 0.0
        %484 = vmatpush2.msra.mxu0 0.0
        %485 = vmatprep.subr.mxu0 0.0
        %486 = vmatpush2.msra.mxu0 0.0
        %487 = vmatprep.subr.mxu0 0.0
        %488 = vmatpush2.msra.mxu0 0.0
        %489 = vmatprep.subr.mxu0 0.0
        %490 = vmatpush2.msra.mxu0 0.0
        %491 = vmatprep.subr.mxu0 0.0
        %492 = vmatpush2.msra.mxu0 0.0
        %493 = vmatprep.subr.mxu0 0.0
        %494 = vmatpush2.msra.mxu0 0.0
        %495 = vmatprep.subr.mxu0 0.0
        %496 = vmatpush2.msra.mxu0 0.0
        %497 = vmatprep.subr.mxu0 0.0
        %498 = vmatpush2.msra.mxu0 0.0
        %499 = vmatprep.subr.mxu0 0.0
        %500 = vmatpush2.msra.mxu0 0.0
        %501 = vmatprep.subr.mxu0 0.0
        %502 = vmatpush2.msra.mxu0 0.0
        %503 = vmatprep.mubr.f32.mxu0 0.0
        %504 = vmatmul.mubr.f32.gmra.mxu0 %v430
        %v505 = vpop.f32.mrf.mxu0
        %v506 = vadd.f32 0.0, %v505
        %v507 = vpop.f32.mrf.mxu0
        %v508 = vadd.f32 0.0, %v507
        %509 = vdwg.mxu0
        %v510 = vadd.f32 %v506, %v508
        %511 = vadd.xlane.f32.xlu0 %v510
        %v512 = vpop.xlane.xlu0 %511
        %v513 = vrcp.pop 256.0
        %v514 = vmul.f32 %v512, %v513
        %v515 = vsub.f32 %v506, %v514
        %v516 = vsub.f32 %v508, %v514
        %v517 = vmul.f32 %v515, %v515
        %v518 = vmul.f32 %v516, %v516
        %v519 = vadd.f32 %v517, %v518
        %520 = vadd.xlane.f32.xlu0 %v519
        %v521 = vpop.xlane.xlu0 %520
        %v522 = vmul.f32 %v521, %v513
        %v523 = vadd.f32 %v522, 1e-05
        %v524 = vrsqrt.pop %v523
        %v525 = vmul.f32 %v515, %v524
        %v526 = vmul.f32 %v516, %v524
        %v527 = vmax.f32 %v525, 0.0
        %v528 = vmax.f32 %v526, 0.0
        %529 = vst [vmem:[%s193] sm:$0xff] %v527
        %530 = vst [vmem:[%s193 + $0x8] sm:$0xff] %v528
        %s531 = sand.u32 %s94, 1
        %s532 = scalar_lea.sflag [#allocation6], %s531
        %s533 = sand.u32 %s94, 1
        %s534 = smul.addr %s533, 16
        %s535 = scalar_lea.vmem [#allocation9], %s534
        // Predicated region
        $region41: #{tpu_custom_call.1} parent=27 // pred_check
          %p536 = pneg %p104
        $region42: #{tpu_custom_call.1} parent=27 // pred_check_branch
          %538 = sbr.rel (%p536) target = $region44
        $region43: #{tpu_custom_call.1} parent=27 // pred_region
          %s540 = ssub.s32 256, 256
          %541 = vsyncadd %s532, %s540
          %s542 = smul.addr %s25, 2
          %s543 = smul.addr %s24, 2
          %s544 = sadd.s32 %s542, %s543
          %s545 = smul.addr %s544, 128
          %s546 = scalar_lea.hbm %s2, %s545
          %s548 = sshll.u32 %s535, 4
          %s549 = int_to_ptr.vmem [resolvable:$true] %s548
          %551 = dma.vmem_to_hbm [thread:$0]  %s549, 256, %s546, %s532
        $region44: #{tpu_custom_call.1} parent=27 // pred_fallthru
          _
      $region28: #{tpu_custom_call.1} parent=5 // pred_fallthru
        _
      %p552 = scmp.le.s32.totalorder 2, %s15
      // Predicated region
      $region45: #{tpu_custom_call.1} parent=5 // pred_check
        %p553 = pneg %p552
      $region46: #{tpu_custom_call.1} parent=5 // pred_check_branch
        %555 = sbr.rel (%p553) target = $region48
      $region47: #{tpu_custom_call.1} parent=5 // pred_region
        %s556 = ssub.s32 %s15, 2
        // Predicated region
        $region49: #{tpu_custom_call.1} parent=47 // pred_check
          %p557 = pneg %p110
        $region50: #{tpu_custom_call.1} parent=47 // pred_check_branch
          %559 = sbr.rel (%p557) target = $region52
        $region51: #{tpu_custom_call.1} parent=47 // pred_region
          %s560 = sand.u32 %s95, 1
          %s561 = scalar_lea.sflag [#allocation6], %s560
          %s562 = sand.u32 %s95, 1
          %s563 = smul.addr %s562, 16
          %s564 = scalar_lea.vmem [#allocation9], %s563
          %565 = dma.done %s561, 256
        $region52: #{tpu_custom_call.1} parent=47 // pred_fallthru
          _
      $region48: #{tpu_custom_call.1} parent=5 // pred_fallthru
        _
    $region6: #{tpu_custom_call.1} parent=1 // loop_footer
      %s19 = sadd.s32 1, %s15
    $region7: #{tpu_custom_call.1} parent=1 // loop_footer_branch
      %14 = sbr.rel target = $region3
    $region8: #{tpu_custom_call.1} parent=1 // loop_exit
      _
    %566 = vsyncpa [#allocation5], 1
    %s567 = scalar_lea.sflag [#allocation5], 1
    %568 = vsyncpa %s567, 1
    %569 = vsyncpa [#allocation8], 1
    %570 = vsyncpa [#allocation6], 1
    %s571 = scalar_lea.sflag [#allocation6], 1
    %572 = vsyncpa %s571, 1

</llo_original>
